<compile_context>
chip_gen: v7x
topology: tpu7x:2x2x1
jax: 0.10.0
libtpu: 0.0.40
codegen_flags: <defaults>
</compile_context>

<pallas_src>
import functools

import jax
import jax.numpy as jnp
from jax.experimental import pallas as pl
from jax.experimental.pallas import tpu as pltpu


LANES = 128          # lane width of every activation / packed weight tile
MAX_TILE_B = 2048    # batch-tile cap: VMEM-safe on all of v5e / v6e / v7x


def _round_up(n, m):
    return ((n + m - 1) // m) * m


def _choose_tile_b(B, max_tile=MAX_TILE_B):
    """Batch tile: large (amortize ~0.35 us per-grid-step overhead), capped at
    MAX_TILE_B, and >= 2 grid steps whenever B allows so the 'parallel' grid
    axis can shard across v7x's two TensorCores (no-op on v5e/v6e)."""
    if B <= 128:
        return max(8, _round_up(B, 8))
    half = _round_up(pl.cdiv(B, 2), 8)
    return int(min(max_tile, half))


# ---------------------------------------------------------------------------
# Kernel
# ---------------------------------------------------------------------------
def _actor_critic_kernel(x_ref, w_ref, b_ref, out_ref, *, num_actions,
                         num_inputs):
    """One batch tile of the fused ActorCritic forward.

    x_ref   : (TILE_B, num_inputs)  f32 observations
    w_ref   : (NI8 + 3*128, 128)    bf16 packed weights (both heads fused)
    b_ref   : (8, 128)              f32 bias rows (b1..b4 in rows 0..3)
    out_ref : (TILE_B, 128)         col 0 = value, cols 1..num_actions = policy
    """
    ni8 = _round_up(num_inputs, 8)      # sublane-aligned layer-1 row budget

    x = x_ref[...].astype(jnp.bfloat16)

    w1 = w_ref[0:num_inputs, :]                          # layer 1 (both heads)
    w2 = w_ref[ni8:ni8 + LANES, :]                       # layer 2 (both heads)
    w3 = w_ref[ni8 + LANES:ni8 + 2 * LANES, :]           # layer 3 (both heads)
    w4 = w_ref[ni8 + 2 * LANES:ni8 + 3 * LANES, :]       # layer 4 (actor only)
    b1 = b_ref[0:1, :]
    b2 = b_ref[1:2, :]
    b3 = b_ref[2:3, :]
    b4 = b_ref[3:4, :]

    dot = lambda a, b: jnp.dot(a, b, preferred_element_type=jnp.float32)
    col = jax.lax.broadcasted_iota(jnp.int32, (1, LANES), 1)

    # critic_linear1 / actor_linear1 (+bias), relu.  bf16 MXU, f32 accumulate.
    h1 = jnp.maximum(dot(x, w1) + b1, 0.0)
    # TODO(synk): nn.Dropout(p=0.5) on the critic branch is stochastic in train
    # mode; implemented as identity (eval-mode semantics) for determinism.
    # critic_linear2 / actor_linear2 (+bias), relu.
    h2 = jnp.maximum(dot(h1.astype(jnp.bfloat16), w2) + b2, 0.0)
    # critic_linear3 (NO relu, lane 0) / actor_linear3 (+relu, lanes 1..H).
    h3 = dot(h2.astype(jnp.bfloat16), w3) + b3
    h3 = jnp.where(col == 0, h3, jnp.maximum(h3, 0.0))
    # actor_linear4 logits at lanes 1..num_actions (value stays in h3 lane 0).
    logits = dot(h3.astype(jnp.bfloat16), w4) + b4

    # Numerically stable softmax over the logit lanes only (all f32).
    is_logit = jnp.logical_and(col >= 1, col < 1 + num_actions)
    m = jnp.max(jnp.where(is_logit, logits, -jnp.inf), axis=-1, keepdims=True)
    e = jnp.where(is_logit, jnp.exp(logits - m), 0.0)
    denom = jnp.sum(e, axis=-1, keepdims=True)
    probs = e * pl.reciprocal(denom, approx=True)   # EUP vrcp; sum==1 to ~1e-3

    # lane 0 = f32 critic value straight from h3; lanes 1..A = policy; rest 0.
    out_ref[...] = jnp.where(col == 0, h3, probs)


# ---------------------------------------------------------------------------
# Wrapper
# ---------------------------------------------------------------------------
def actor_critic_forward(x, packed_w, packed_b, num_actions):
    """x: (B, num_inputs) float -> (value (B, 1), policy (B, num_actions))."""
    B, num_inputs = x.shape
    tile_b = _choose_tile_b(B)
    grid = (pl.cdiv(B, tile_b),)

    out = pl.pallas_call(
        functools.partial(_actor_critic_kernel, num_actions=num_actions,
                          num_inputs=num_inputs),
        out_shape=jax.ShapeDtypeStruct((B, LANES), jnp.float32),
        grid=grid,
        in_specs=[
            # observations stream over the batch grid (ragged last tile OK:
            # garbage rows are computed but their writes are clipped to B)
            pl.BlockSpec((tile_b, num_inputs), lambda i: (i, 0)),
            # packed bf16 weights: constant index_map -> VMEM-resident
            pl.BlockSpec(packed_w.shape, lambda i: (0, 0)),
            # f32 bias rows: constant index_map -> VMEM-resident
            pl.BlockSpec(packed_b.shape, lambda i: (0, 0)),
        ],
        out_specs=pl.BlockSpec((tile_b, LANES), lambda i: (i, 0)),
        compiler_params=pltpu.CompilerParams(
            dimension_semantics=("parallel",),
            # headroom above v5e's 16 MiB scoped default, well under v7x's
            # 64 MiB physical VMEM per TensorCore.
            vmem_limit_bytes=32 * 1024 * 1024),
    )(x.astype(jnp.float32), packed_w, packed_b)

    value = out[:, 0:1]
    policy = out[:, 1:1 + num_actions]
    return value, policy


# ---------------------------------------------------------------------------
# Host-side parameter packing (weights stored as (in, out), biases as (out,)).
# Runs once per parameter set, not per forward call.
# ---------------------------------------------------------------------------
def pack_params(params, num_inputs, hidden, num_actions):
    (cw1, cb1, cw2, cb2, cw3, cb3,
     aw1, ab1, aw2, ab2, aw3, ab3, aw4, ab4) = params
    H, A = hidden, num_actions
    assert max(2 * H, 8 + H, 1 + H, 1 + A) <= LANES, \
        "fused layout needs both heads to fit in 128 lanes"

    ni8 = _round_up(num_inputs, 8)

    w = jnp.zeros((ni8 + 3 * LANES, LANES), jnp.float32)
    # layer 1: x -> h1
    w = w.at[:num_inputs, 0:H].set(cw1)
    w = w.at[:num_inputs, H:2 * H].set(aw1)
    # layer 2: h1 -> h2
    o = ni8
    w = w.at[o:o + H, 0:8].set(cw2)
    w = w.at[o + H:o + 2 * H, 8:8 + H].set(aw2)
    # layer 3: h2 -> h3
    o = ni8 + LANES
    w = w.at[o:o + 8, 0:1].set(cw3)
    w = w.at[o + 8:o + 8 + H, 1:1 + H].set(aw3)
    # layer 4: h3 -> logits (actor only; value read from h3 lane 0 in-kernel)
    o = ni8 + 2 * LANES
    w = w.at[o + 1:o + 1 + H, 1:1 + A].set(aw4)

    b = jnp.zeros((8, LANES), jnp.float32)
    b = b.at[0, 0:H].set(cb1)
    b = b.at[0, H:2 * H].set(ab1)
    b = b.at[1, 0:8].set(cb2)
    b = b.at[1, 8:8 + H].set(ab2)
    b = b.at[2, 0:1].set(cb3)
    b = b.at[2, 1:1 + H].set(ab3)
    b = b.at[3, 1:1 + A].set(ab4)

    # bf16 weights (MXU-native on v5e/v6e/v7x); biases stay f32.
    return w.astype(jnp.bfloat16), b


def init_linear(key, fan_in, fan_out):
    """nn.Linear default init: U(-1/sqrt(fan_in), 1/sqrt(fan_in)).
    Weight already transposed to (in, out); bias as (out,)."""
    kw, kb = jax.random.split(key)
    bound = 1.0 / jnp.sqrt(jnp.float32(fan_in))
    w = jax.random.uniform(kw, (fan_in, fan_out), jnp.float32, -bound, bound)
    b = jax.random.uniform(kb, (fan_out,), jnp.float32, -bound, bound)
    return w, b


def init_params(key, num_inputs, hidden_size, num_actions):
    keys = jax.random.split(key, 7)
    cw1, cb1 = init_linear(keys[0], num_inputs, hidden_size)   # critic_linear1
    cw2, cb2 = init_linear(keys[1], hidden_size, 8)            # critic_linear2
    cw3, cb3 = init_linear(keys[2], 8, 1)                      # critic_linear3
    aw1, ab1 = init_linear(keys[3], num_inputs, hidden_size)   # actor_linear1
    aw2, ab2 = init_linear(keys[4], hidden_size, hidden_size)  # actor_linear2
    aw3, ab3 = init_linear(keys[5], hidden_size, hidden_size)  # actor_linear3
    aw4, ab4 = init_linear(keys[6], hidden_size, num_actions)  # actor_linear4
    return (cw1, cb1, cw2, cb2, cw3, cb3,
            aw1, ab1, aw2, ab2, aw3, ab3, aw4, ab4)


def reference_forward(x, params):
    """Pure-JAX reference of the PyTorch forward (dropout = eval-mode identity)."""
    (cw1, cb1, cw2, cb2, cw3, cb3,
     aw1, ab1, aw2, ab2, aw3, ab3, aw4, ab4) = params
    relu = lambda t: jnp.maximum(t, 0.0)
    v = relu(x @ cw1 + cb1)
    v = relu(v @ cw2 + cb2)
    v = v @ cw3 + cb3
    p = relu(x @ aw1 + ab1)
    p = relu(p @ aw2 + ab2)
    p = relu(p @ aw3 + ab3)
    probs = jax.nn.softmax(p @ aw4 + ab4, axis=-1)
    return v, probs


if __name__ == "__main__":
    # Small shapes consistent with the module (small discrete-action env).
    num_inputs = 4
    num_actions = 6
    hidden = 32          # small stand-in for hidden_size=256 (fused 128-lane layout)
    B = 256              # batched rollout -> 2 grid steps of 128 (feeds both v7x TCs)

    root = jax.random.PRNGKey(0)
    k_obs, k_params = jax.random.split(root)

    params = init_params(k_params, num_inputs, hidden, num_actions)
    packed_w, packed_b = pack_params(params, num_inputs, hidden, num_actions)

    x = jax.random.normal(k_obs, (B, num_inputs), jnp.float32)

    value, policy = actor_critic_forward(x, packed_w, packed_b, num_actions)
    value = jax.block_until_ready(value)
    policy = jax.block_until_ready(policy)

    assert value.shape == (B, 1)
    assert policy.shape == (B, num_actions)
    assert bool(jnp.isfinite(value).all())
    assert bool(jnp.isfinite(policy).all())
    # approx=True reciprocal: policy rows sum to 1 only to ~1e-3.
    assert bool(jnp.allclose(jnp.sum(policy, axis=-1), 1.0, atol=5e-3))

    # Cross-check the fused / bf16 kernel against the f32 reference.
    value_ref, policy_ref = reference_forward(x, params)
    assert bool(jnp.allclose(value, value_ref, rtol=3e-2, atol=3e-2))
    assert bool(jnp.allclose(policy, policy_ref, rtol=3e-2, atol=3e-2))

    print("KERNEL_OK")
</pallas_src>

<mosaic_0001>
module attributes {stable_mosaic.version = 11 : i64} {
  func.func @_actor_critic_kernel(%arg0: i32, %arg1: memref<128x4xf32, #tpu.memory_space<vmem>>, %arg2: memref<392x128xbf16, #tpu.memory_space<vmem>>, %arg3: memref<8x128xf32, #tpu.memory_space<vmem>>, %arg4: memref<128x128xf32, #tpu.memory_space<vmem>>) attributes {dimension_semantics = [#tpu.dimension_semantics<parallel>], iteration_bounds = array<i64: 2>, scalar_prefetch = 0 : i64, scratch_operands = 0 : i64, tpu.core_type = #tpu.core_type<tc>, window_params = [{transform_indices = @transform_0, window_bounds = array<i64: 128, 4>}, {pipeline_mode = #tpu.pipeline_mode<synchronous>, transform_indices = @transform_1, window_bounds = array<i64: 392, 128>}, {pipeline_mode = #tpu.pipeline_mode<synchronous>, transform_indices = @transform_2, window_bounds = array<i64: 8, 128>}, {transform_indices = @transform_3, window_bounds = array<i64: 128, 128>}]} {
    %c0 = arith.constant 0 : index
    %c0_0 = arith.constant 0 : index
    %0 = vector.load %arg1[%c0, %c0_0] : memref<128x4xf32, #tpu.memory_space<vmem>>, vector<128x4xf32>
    %1 = arith.truncf %0 : vector<128x4xf32> to vector<128x4xbf16>
    %c0_1 = arith.constant 0 : index
    %c0_2 = arith.constant 0 : index
    %2 = vector.load %arg2[%c0_1, %c0_2] : memref<392x128xbf16, #tpu.memory_space<vmem>>, vector<4x128xbf16>
    %c8 = arith.constant 8 : index
    %c0_3 = arith.constant 0 : index
    %3 = vector.load %arg2[%c8, %c0_3] : memref<392x128xbf16, #tpu.memory_space<vmem>>, vector<128x128xbf16>
    %c136 = arith.constant 136 : index
    %c0_4 = arith.constant 0 : index
    %4 = vector.load %arg2[%c136, %c0_4] : memref<392x128xbf16, #tpu.memory_space<vmem>>, vector<128x128xbf16>
    %c264 = arith.constant 264 : index
    %c0_5 = arith.constant 0 : index
    %5 = vector.load %arg2[%c264, %c0_5] : memref<392x128xbf16, #tpu.memory_space<vmem>>, vector<128x128xbf16>
    %c0_6 = arith.constant 0 : index
    %c0_7 = arith.constant 0 : index
    %6 = vector.load %arg3[%c0_6, %c0_7] : memref<8x128xf32, #tpu.memory_space<vmem>>, vector<1x128xf32>
    %c1 = arith.constant 1 : index
    %c0_8 = arith.constant 0 : index
    %7 = vector.load %arg3[%c1, %c0_8] : memref<8x128xf32, #tpu.memory_space<vmem>>, vector<1x128xf32>
    %c2 = arith.constant 2 : index
    %c0_9 = arith.constant 0 : index
    %8 = vector.load %arg3[%c2, %c0_9] : memref<8x128xf32, #tpu.memory_space<vmem>>, vector<1x128xf32>
    %c3 = arith.constant 3 : index
    %c0_10 = arith.constant 0 : index
    %9 = vector.load %arg3[%c3, %c0_10] : memref<8x128xf32, #tpu.memory_space<vmem>>, vector<1x128xf32>
    %10 = tpu.iota {dimensions = array<i32: 1>} : vector<1x128xi32>
    %cst = arith.constant dense<0.000000e+00> : vector<128x128xf32>
    %11 = tpu.matmul %1, %2, %cst {dimension_numbers = #tpu.dot_dimension_numbers<[1], [0], [0], [1], [0, 0, 1, 1], [], []>} : vector<128x4xbf16>, vector<4x128xbf16>, vector<128x128xf32> -> vector<128x128xf32>
    %12 = vector.broadcast %6 : vector<1x128xf32> to vector<128x128xf32>
    %13 = arith.addf %11, %12 : vector<128x128xf32>
    %cst_11 = arith.constant 0.000000e+00 : f32
    %14 = vector.broadcast %cst_11 : f32 to vector<128x128xf32>
    %15 = arith.maximumf %13, %14 : vector<128x128xf32>
    %16 = arith.truncf %15 : vector<128x128xf32> to vector<128x128xbf16>
    %cst_12 = arith.constant dense<0.000000e+00> : vector<128x128xf32>
    %17 = tpu.matmul %16, %3, %cst_12 {dimension_numbers = #tpu.dot_dimension_numbers<[1], [0], [0], [1], [0, 0, 1, 1], [], []>} : vector<128x128xbf16>, vector<128x128xbf16>, vector<128x128xf32> -> vector<128x128xf32>
    %18 = vector.broadcast %7 : vector<1x128xf32> to vector<128x128xf32>
    %19 = arith.addf %17, %18 : vector<128x128xf32>
    %cst_13 = arith.constant 0.000000e+00 : f32
    %20 = vector.broadcast %cst_13 : f32 to vector<128x128xf32>
    %21 = arith.maximumf %19, %20 : vector<128x128xf32>
    %22 = arith.truncf %21 : vector<128x128xf32> to vector<128x128xbf16>
    %cst_14 = arith.constant dense<0.000000e+00> : vector<128x128xf32>
    %23 = tpu.matmul %22, %4, %cst_14 {dimension_numbers = #tpu.dot_dimension_numbers<[1], [0], [0], [1], [0, 0, 1, 1], [], []>} : vector<128x128xbf16>, vector<128x128xbf16>, vector<128x128xf32> -> vector<128x128xf32>
    %24 = vector.broadcast %8 : vector<1x128xf32> to vector<128x128xf32>
    %25 = arith.addf %23, %24 : vector<128x128xf32>
    %c0_i32 = arith.constant 0 : i32
    %26 = vector.broadcast %c0_i32 : i32 to vector<1x128xi32>
    %27 = arith.cmpi eq, %10, %26 : vector<1x128xi32>
    %cst_15 = arith.constant 0.000000e+00 : f32
    %28 = vector.broadcast %cst_15 : f32 to vector<128x128xf32>
    %29 = arith.maximumf %25, %28 : vector<128x128xf32>
    %30 = vector.shape_cast %27 : vector<1x128xi1> to vector<1x128xi1>
    %31 = vector.broadcast %30 : vector<1x128xi1> to vector<128x128xi1>
    %32 = arith.select %31, %25, %29 : vector<128x128xi1>, vector<128x128xf32>
    %33 = arith.truncf %32 : vector<128x128xf32> to vector<128x128xbf16>
    %cst_16 = arith.constant dense<0.000000e+00> : vector<128x128xf32>
    %34 = tpu.matmul %33, %5, %cst_16 {dimension_numbers = #tpu.dot_dimension_numbers<[1], [0], [0], [1], [0, 0, 1, 1], [], []>} : vector<128x128xbf16>, vector<128x128xbf16>, vector<128x128xf32> -> vector<128x128xf32>
    %35 = vector.broadcast %9 : vector<1x128xf32> to vector<128x128xf32>
    %36 = arith.addf %34, %35 : vector<128x128xf32>
    %c1_i32 = arith.constant 1 : i32
    %37 = vector.broadcast %c1_i32 : i32 to vector<1x128xi32>
    %38 = arith.cmpi sge, %10, %37 : vector<1x128xi32>
    %c7_i32 = arith.constant 7 : i32
    %39 = vector.broadcast %c7_i32 : i32 to vector<1x128xi32>
    %40 = arith.cmpi slt, %10, %39 : vector<1x128xi32>
    %41 = arith.andi %38, %40 : vector<1x128xi1>
    %cst_17 = arith.constant 0xFF800000 : f32
    %42 = vector.shape_cast %41 : vector<1x128xi1> to vector<1x128xi1>
    %43 = vector.broadcast %42 : vector<1x128xi1> to vector<128x128xi1>
    %44 = vector.broadcast %cst_17 : f32 to vector<128x128xf32>
    %45 = arith.select %43, %36, %44 : vector<128x128xi1>, vector<128x128xf32>
    %cst_18 = arith.constant dense<0xFF800000> : vector<128xf32>
    %46 = vector.multi_reduction <maximumf>, %45, %cst_18 [1] : vector<128x128xf32> to vector<128xf32>
    %47 = vector.shape_cast %46 : vector<128xf32> to vector<128x1xf32>
    %48 = vector.broadcast %47 : vector<128x1xf32> to vector<128x128xf32>
    %49 = arith.subf %36, %48 : vector<128x128xf32>
    %50 = math.exp %49 : vector<128x128xf32>
    %cst_19 = arith.constant 0.000000e+00 : f32
    %51 = vector.shape_cast %41 : vector<1x128xi1> to vector<1x128xi1>
    %52 = vector.broadcast %51 : vector<1x128xi1> to vector<128x128xi1>
    %53 = vector.broadcast %cst_19 : f32 to vector<128x128xf32>
    %54 = arith.select %52, %50, %53 : vector<128x128xi1>, vector<128x128xf32>
    %cst_20 = arith.constant dense<0.000000e+00> : vector<128xf32>
    %55 = vector.multi_reduction <add>, %54, %cst_20 [1] : vector<128x128xf32> to vector<128xf32>
    %56 = vector.shape_cast %55 : vector<128xf32> to vector<128x1xf32>
    %57 = tpu.reciprocal %56 {approx = true} : vector<128x1xf32> -> vector<128x1xf32>
    %58 = vector.broadcast %57 : vector<128x1xf32> to vector<128x128xf32>
    %59 = arith.mulf %54, %58 : vector<128x128xf32>
    %c0_i32_21 = arith.constant 0 : i32
    %60 = vector.broadcast %c0_i32_21 : i32 to vector<1x128xi32>
    %61 = arith.cmpi eq, %10, %60 : vector<1x128xi32>
    %62 = vector.shape_cast %61 : vector<1x128xi1> to vector<1x128xi1>
    %63 = vector.broadcast %62 : vector<1x128xi1> to vector<128x128xi1>
    %64 = arith.select %63, %32, %59 : vector<128x128xi1>, vector<128x128xf32>
    %c0_22 = arith.constant 0 : index
    %c0_23 = arith.constant 0 : index
    %65 = vector.load %arg4[%c0_22, %c0_23] : memref<128x128xf32, #tpu.memory_space<vmem>>, vector<128x128xf32>
    tpu.vector_store %arg4[%c0_22, %c0_23], %64 {strides = array<i32>} : memref<128x128xf32, #tpu.memory_space<vmem>>, vector<128x128xf32>,
    return
  }
  func.func @transform_0(%arg0: i32) -> (i32, i32) {
    %c0_i32 = arith.constant 0 : i32
    %c0_i32_0 = arith.constant 0 : i32
    return %arg0, %c0_i32 : i32, i32
  }
  func.func @transform_1(%arg0: i32) -> (i32, i32) {
    %c0_i32 = arith.constant 0 : i32
    %c0_i32_0 = arith.constant 0 : i32
    %c0_i32_1 = arith.constant 0 : i32
    return %c0_i32, %c0_i32_0 : i32, i32
  }
  func.func @transform_2(%arg0: i32) -> (i32, i32) {
    %c0_i32 = arith.constant 0 : i32
    %c0_i32_0 = arith.constant 0 : i32
    %c0_i32_1 = arith.constant 0 : i32
    return %c0_i32, %c0_i32_0 : i32, i32
  }
  func.func @transform_3(%arg0: i32) -> (i32, i32) {
    %c0_i32 = arith.constant 0 : i32
    %c0_i32_0 = arith.constant 0 : i32
    return %arg0, %c0_i32 : i32, i32
  }
}

</mosaic_0001>

<llo_original>
// kernel: tpu_custom_call.1
$region0: #{tpu_custom_call.1}
  #allocation0 [shape = 'u32[]', space=smem, size = 0x4, offset = 0x4, fixed_abs, tag = 'smem constant byte address 0x4 - core index']
  #allocation1 [shape = 'u32[144,128]{1,0:T(1,128)}', space=vmem, size = 0x12000, scoped, tag = 'internal scratch']
  %s0 = inlined_call_operand.vmem [shape: f32[256,4], index: 0, kind: input, shape index: {}]
  %s1 = inlined_call_operand.vmem [shape: bf16[392,128], index: 1, kind: input, shape index: {}]
  %s2 = inlined_call_operand.vmem [shape: f32[8,128], index: 2, kind: input, shape index: {}]
  %s3 = inlined_call_operand.hbm [shape: f32[256,128], index: 3, kind: output, shape index: {}]
  %s4 = sld [smem:[#allocation0]]
  $region45: #{tpu_custom_call.1} parent=0
    _
  %s6 = ssub.s32 1, %s4
  %s7 = scalar_select 0, %s6, %s4
  $region1: #{tpu_custom_call.1} parent=0
    #allocation2 [shape = 'u8[131072]{0}', space=vmem, size = 0x20000, scoped, tag = 'output window, operand 0']
    #allocation3 [shape = 's32[2]{0}', space=sflag, size = 0x8, scoped, tag = 'scoped memory for tpu_custom_call.1']
    %8 = vsyncpa [#allocation3], 0
    %s9 = scalar_lea.sflag [#allocation3], 1
    %10 = vsyncpa %s9, 0
    loop: start=0, step=1, limit=4
    $region2: #{tpu_custom_call.1} parent=1 // loop_pre_header
      _
    $region3: #{tpu_custom_call.1} parent=1 // loop_header
      %s12 = sphi 0, %s16
      %p13 = scmp.ge.s32.totalorder %s12, 4
      %s22 = sphi 0, %s24
      %s25 = sphi 0, %s22
      %s26 = sphi 0, %s25
      %s42 = sphi 0, %s26
      %s46 = sphi 0, %s46
      %s48 = sphi 0, %s46
      %s49 = sphi 0, %s48
      %s63 = sphi 0, %s49
      %s67 = sphi 0, %s67
      %s69 = sphi 0, %s67
      %s70 = sphi 0, %s69
      %s84 = sphi 0, %s70
      %s90 = sphi 0, %s92
      %s93 = sphi 0, %s90
      %s94 = sphi 0, %s93
      %s110 = sphi 0, %s94
    $region4: #{tpu_custom_call.1} parent=1 // loop_header_branch
      %15 = sbr.rel (%p13) target = $region8
    $region5: #{tpu_custom_call.1} parent=1 // loop_body
      %s17 = ssub.s32 %s12, 1
      %s18 = ssub.s32 %s12, 2
      %s19 = sadd.s32 %s12, 1
      %s20 = ssub.s32 %s12, %s19
      %p21 = scmp.eq.s32.totalorder %s20, 0
      %s23 = sadd.s32 %s22, 1
      %s24 = scalar_select %p21, %s22, %s23
      %p27 = pneg %p21
      %p28 = scmp.eq.s32.totalorder %s12, 1
      %p29 = por %p27, %p28
      %p30 = scmp.ne.s32.totalorder %s22, %s25
      %p31 = scmp.eq.s32.totalorder %s12, 0
      %p32 = por %p30, %p31
      %p33 = scmp.ne.s32.totalorder %s22, %s25
      %p34 = scmp.eq.s32.totalorder %s17, 1
      %p35 = por %p33, %p34
      %p36 = scmp.ne.s32.totalorder %s25, %s26
      %p37 = scmp.eq.s32.totalorder %s17, 0
      %p38 = por %p36, %p37
      %p39 = scmp.ne.s32.totalorder %s25, %s26
      %p40 = scmp.eq.s32.totalorder %s18, 1
      %p41 = por %p39, %p40
      %p43 = scmp.ne.s32.totalorder %s26, %s42
      %p44 = scmp.eq.s32.totalorder %s18, 0
      %p45 = por %p43, %p44
      %s47 = sadd.s32 %s46, 1
      %p50 = scmp.eq.s32.totalorder %s12, 1
      %p51 = scmp.ne.s32.totalorder %s46, %s48
      %p52 = scmp.eq.s32.totalorder %s12, 0
      %p53 = por %p51, %p52
      %p54 = scmp.ne.s32.totalorder %s46, %s48
      %p55 = scmp.eq.s32.totalorder %s17, 1
      %p56 = por %p54, %p55
      %p57 = scmp.ne.s32.totalorder %s48, %s49
      %p58 = scmp.eq.s32.totalorder %s17, 0
      %p59 = por %p57, %p58
      %p60 = scmp.ne.s32.totalorder %s48, %s49
      %p61 = scmp.eq.s32.totalorder %s18, 1
      %p62 = por %p60, %p61
      %p64 = scmp.ne.s32.totalorder %s49, %s63
      %p65 = scmp.eq.s32.totalorder %s18, 0
      %p66 = por %p64, %p65
      %s68 = sadd.s32 %s67, 1
      %p71 = scmp.eq.s32.totalorder %s12, 1
      %p72 = scmp.ne.s32.totalorder %s67, %s69
      %p73 = scmp.eq.s32.totalorder %s12, 0
      %p74 = por %p72, %p73
      %p75 = scmp.ne.s32.totalorder %s67, %s69
      %p76 = scmp.eq.s32.totalorder %s17, 1
      %p77 = por %p75, %p76
      %p78 = scmp.ne.s32.totalorder %s69, %s70
      %p79 = scmp.eq.s32.totalorder %s17, 0
      %p80 = por %p78, %p79
      %p81 = scmp.ne.s32.totalorder %s69, %s70
      %p82 = scmp.eq.s32.totalorder %s18, 1
      %p83 = por %p81, %p82
      %p85 = scmp.ne.s32.totalorder %s70, %s84
      %p86 = scmp.eq.s32.totalorder %s18, 0
      %p87 = por %p85, %p86
      %s88 = ssub.s32 %s12, %s19
      %p89 = scmp.eq.s32.totalorder %s88, 0
      %s91 = sadd.s32 %s90, 1
      %s92 = scalar_select %p89, %s90, %s91
      %p95 = pneg %p89
      %p96 = scmp.eq.s32.totalorder %s12, 1
      %p97 = por %p95, %p96
      %p98 = scmp.ne.s32.totalorder %s90, %s93
      %p99 = scmp.eq.s32.totalorder %s12, 0
      %p100 = por %p98, %p99
      %p101 = scmp.ne.s32.totalorder %s90, %s93
      %p102 = scmp.eq.s32.totalorder %s17, 1
      %p103 = por %p101, %p102
      %p104 = scmp.ne.s32.totalorder %s93, %s94
      %p105 = scmp.eq.s32.totalorder %s17, 0
      %p106 = por %p104, %p105
      %p107 = scmp.ne.s32.totalorder %s93, %s94
      %p108 = scmp.eq.s32.totalorder %s18, 1
      %p109 = por %p107, %p108
      %p111 = scmp.ne.s32.totalorder %s94, %s110
      %p112 = scmp.eq.s32.totalorder %s18, 0
      %p113 = por %p111, %p112
      %p114 = scmp.le.s32.totalorder 1, %s12
      %p115 = scmp.lt.s32.totalorder %s12, 3
      %p116 = pnand %p114, %p115
      %p117 = pneg %p116
      // Predicated region
      $region9: #{tpu_custom_call.1} parent=5 // pred_check
        _
      $region10: #{tpu_custom_call.1} parent=5 // pred_check_branch
        %119 = sbr.rel (%p116) target = $region12
      $region11: #{tpu_custom_call.1} parent=5 // pred_region
        %s120 = ssub.s32 %s12, 1
        // Predicated region
        $region13: #{tpu_custom_call.1} parent=11 // pred_check
          %p121 = pneg %p59
        $region14: #{tpu_custom_call.1} parent=11 // pred_check_branch
          %123 = sbr.rel (%p121) target = $region16
        $region15: #{tpu_custom_call.1} parent=11 // pred_region
          _
        $region16: #{tpu_custom_call.1} parent=11 // pred_fallthru
          _
        // Predicated region
        $region17: #{tpu_custom_call.1} parent=11 // pred_check
          %p124 = pneg %p80
        $region18: #{tpu_custom_call.1} parent=11 // pred_check_branch
          %126 = sbr.rel (%p124) target = $region20
        $region19: #{tpu_custom_call.1} parent=11 // pred_region
          _
        $region20: #{tpu_custom_call.1} parent=11 // pred_fallthru
          _
      $region12: #{tpu_custom_call.1} parent=5 // pred_fallthru
        _
      %p127 = scmp.lt.s32.totalorder %s12, 2
      // Predicated region
      $region21: #{tpu_custom_call.1} parent=5 // pred_check
        %p128 = pneg %p127
      $region22: #{tpu_custom_call.1} parent=5 // pred_check_branch
        %130 = sbr.rel (%p128) target = $region24
      $region23: #{tpu_custom_call.1} parent=5 // pred_region
        // Predicated region
        $region25: #{tpu_custom_call.1} parent=23 // pred_check
          %p131 = pneg %p32
        $region26: #{tpu_custom_call.1} parent=23 // pred_check_branch
          %133 = sbr.rel (%p131) target = $region28
        $region27: #{tpu_custom_call.1} parent=23 // pred_region
          %s134 = smul.u32 16, %s12
          %p135 = scmp.lt.s32.totalorder %s134, 31
          %s136 = scalar_select %p135, %s134, 31
          %s137 = smul.addr %s136, 8
          %s138 = scalar_lea.vmem %s0, %s137
          %s139 = smul.u32 16, %s12
        $region28: #{tpu_custom_call.1} parent=23 // pred_fallthru
          _
      $region24: #{tpu_custom_call.1} parent=5 // pred_fallthru
        _
      %p140 = scmp.le.s32.totalorder 1, %s12
      %p141 = scmp.lt.s32.totalorder %s12, 3
      %p142 = pnand %p140, %p141
      %p143 = pneg %p142
      // Predicated region
      $region29: #{tpu_custom_call.1} parent=5 // pred_check
        _
      $region30: #{tpu_custom_call.1} parent=5 // pred_check_branch
        %145 = sbr.rel (%p142) target = $region32
      $region31: #{tpu_custom_call.1} parent=5 // pred_region
        %s146 = ssub.s32 %s12, 1
        %s147 = smul.u32 16, %s17
        %p148 = scmp.lt.s32.totalorder %s147, 31
        %s149 = scalar_select %p148, %s147, 31
        %s150 = smul.addr %s149, 8
        %s151 = scalar_lea.vmem %s0, %s150
        %p152 = pneg %p38
        %p153 = pneg %p35
        %p154 = pneg %p59
        %p155 = pneg %p56
        %p156 = pneg %p80
        %p157 = pneg %p77
        %p158 = pneg %p106
        %p159 = pneg %p103
        %s160 = sand.u32 %s93, 1
        %s161 = scalar_lea.sflag [#allocation3], %s160
        %s162 = sand.u32 %s93, 1
        %s163 = smul.addr %s162, 128
        %s164 = scalar_lea.vmem [#allocation2], %s163
        %s165 = smul.u32 16, %s17
        %p166 = scmp.lt.s32.totalorder %s165, 31
        %s167 = scalar_select %p166, %s165, 31
        %s168 = smul.addr %s167, 8
        %s169 = scalar_lea.vmem %s0, %s168
        %s170 = smul.u32 16, %s17
        %s171 = smul.u32 16, %s17
        %v173 = vld [vmem:[%s169] sm:$0xff]
        %v174 = vld [vmem:[%s169 + $0x8] sm:$0xff]
        %v175 = vld [vmem:[%s169 + $0x10] sm:$0xff]
        %v176 = vld [vmem:[%s169 + $0x18] sm:$0xff]
        %v177 = vld [vmem:[%s169 + $0x20] sm:$0xff]
        %v178 = vld [vmem:[%s169 + $0x28] sm:$0xff]
        %v179 = vld [vmem:[%s169 + $0x30] sm:$0xff]
        %v180 = vld [vmem:[%s169 + $0x38] sm:$0xff]
        %v181 = vld [vmem:[%s169 + $0x40] sm:$0xff]
        %v182 = vld [vmem:[%s169 + $0x48] sm:$0xff]
        %v183 = vld [vmem:[%s169 + $0x50] sm:$0xff]
        %v184 = vld [vmem:[%s169 + $0x58] sm:$0xff]
        %v185 = vld [vmem:[%s169 + $0x60] sm:$0xff]
        %v186 = vld [vmem:[%s169 + $0x68] sm:$0xff]
        %v187 = vld [vmem:[%s169 + $0x70] sm:$0xff]
        %v188 = vld [vmem:[%s169 + $0x78] sm:$0xff]
        %v189 = vpack.c.bf16 %v174, %v173
        %v190 = vpack.c.bf16 %v176, %v175
        %v191 = vpack.c.bf16 %v178, %v177
        %v192 = vpack.c.bf16 %v180, %v179
        %v193 = vpack.c.bf16 %v182, %v181
        %v194 = vpack.c.bf16 %v184, %v183
        %v195 = vpack.c.bf16 %v186, %v185
        %v196 = vpack.c.bf16 %v188, %v187
        %v197 = vld [vmem:[%s1] sm:$0x3]
        %v198 = vld [vmem:[%s1 + $0x4] sm:$0xf]
        %v199 = vld [vmem:[%s1 + $0x8] sm:$0xf]
        %v200 = vld [vmem:[%s1 + $0xc] sm:$0xf]
        %v201 = vld [vmem:[%s1 + $0x10] sm:$0xf]
        %v202 = vld [vmem:[%s1 + $0x14] sm:$0xf]
        %v203 = vld [vmem:[%s1 + $0x18] sm:$0xf]
        %v204 = vld [vmem:[%s1 + $0x1c] sm:$0xf]
        %v205 = vld [vmem:[%s1 + $0x20] sm:$0xf]
        %v206 = vld [vmem:[%s1 + $0x24] sm:$0xf]
        %v207 = vld [vmem:[%s1 + $0x28] sm:$0xf]
        %v208 = vld [vmem:[%s1 + $0x2c] sm:$0xf]
        %v209 = vld [vmem:[%s1 + $0x30] sm:$0xf]
        %v210 = vld [vmem:[%s1 + $0x34] sm:$0xf]
        %v211 = vld [vmem:[%s1 + $0x38] sm:$0xf]
        %v212 = vld [vmem:[%s1 + $0x3c] sm:$0xf]
        %v213 = vld [vmem:[%s1 + $0x40] sm:$0xf]
        %v214 = vld [vmem:[%s1 + $0x44] sm:$0xf]
        %v215 = vld [vmem:[%s1 + $0x48] sm:$0xf]
        %v216 = vld [vmem:[%s1 + $0x4c] sm:$0xf]
        %v217 = vld [vmem:[%s1 + $0x50] sm:$0xf]
        %v218 = vld [vmem:[%s1 + $0x54] sm:$0xf]
        %v219 = vld [vmem:[%s1 + $0x58] sm:$0xf]
        %v220 = vld [vmem:[%s1 + $0x5c] sm:$0xf]
        %v221 = vld [vmem:[%s1 + $0x60] sm:$0xf]
        %v222 = vld [vmem:[%s1 + $0x64] sm:$0xf]
        %v223 = vld [vmem:[%s1 + $0x68] sm:$0xf]
        %v224 = vld [vmem:[%s1 + $0x6c] sm:$0xf]
        %v225 = vld [vmem:[%s1 + $0x70] sm:$0xf]
        %v226 = vld [vmem:[%s1 + $0x74] sm:$0xf]
        %v227 = vld [vmem:[%s1 + $0x78] sm:$0xf]
        %v228 = vld [vmem:[%s1 + $0x7c] sm:$0xf]
        %v229 = vld [vmem:[%s1 + $0x80] sm:$0xf]
        %v230 = vld [vmem:[%s1 + $0x84] sm:$0xf]
        %v231 = vld [vmem:[%s1 + $0x88] sm:$0xf]
        %v232 = vld [vmem:[%s1 + $0x8c] sm:$0xf]
        %v233 = vld [vmem:[%s1 + $0x90] sm:$0xf]
        %v234 = vld [vmem:[%s1 + $0x94] sm:$0xf]
        %v235 = vld [vmem:[%s1 + $0x98] sm:$0xf]
        %v236 = vld [vmem:[%s1 + $0x9c] sm:$0xf]
        %v237 = vld [vmem:[%s1 + $0xa0] sm:$0xf]
        %v238 = vld [vmem:[%s1 + $0xa4] sm:$0xf]
        %v239 = vld [vmem:[%s1 + $0xa8] sm:$0xf]
        %v240 = vld [vmem:[%s1 + $0xac] sm:$0xf]
        %v241 = vld [vmem:[%s1 + $0xb0] sm:$0xf]
        %v242 = vld [vmem:[%s1 + $0xb4] sm:$0xf]
        %v243 = vld [vmem:[%s1 + $0xb8] sm:$0xf]
        %v244 = vld [vmem:[%s1 + $0xbc] sm:$0xf]
        %v245 = vld [vmem:[%s1 + $0xc0] sm:$0xf]
        %v246 = vld [vmem:[%s2] sm:$0x1]
        %v247 = vld [vmem:[%s2 + $0x1] sm:$0x1]
        %v248 = vld [vmem:[%s2 + $0x2] sm:$0x1]
        %v249 = vld [vmem:[%s2 + $0x3] sm:$0x1]
        %v250 = vlaneseq
        %v251 = vand.u32 %v250, 127
        %v252 = vlaneseq
        %v253 = vshrl.u32 %v252, 7
        %v254 = vsub.s32 0, %v253
        %v255 = vrot.slane %v246, %v254
        %vm256 = vcmask 31744
        %v258 = vsel %vm256, %v189, 0
        %v261 = vsel %vm256, %v190, 0
        %v264 = vsel %vm256, %v191, 0
        %v267 = vsel %vm256, %v192, 0
        %v270 = vsel %vm256, %v193, 0
        %v273 = vsel %vm256, %v194, 0
        %v276 = vsel %vm256, %v195, 0
        %v279 = vsel %vm256, %v196, 0
        %vm281 = vcmask 1041408
        %v283 = vsel %vm281, %v197, 0
        %285 = vmatprep.subr.bf16.mxu0 0
        %286 = vmatpush1.bf16.msra.mxu0 %v283
        %287 = vmatprep.subr.bf16.mxu0 0
        %288 = vmatpush1.bf16.msra.mxu0 0
        %289 = vmatprep.subr.bf16.mxu0 0
        %290 = vmatpush1.bf16.msra.mxu0 0
        %291 = vmatprep.subr.bf16.mxu0 0
        %292 = vmatpush1.bf16.msra.mxu0 0
        %293 = vmatprep.subr.bf16.mxu0 0
        %294 = vmatpush1.bf16.msra.mxu0 0
        %295 = vmatprep.subr.bf16.mxu0 0
        %296 = vmatpush1.bf16.msra.mxu0 0
        %297 = vmatprep.subr.bf16.mxu0 0
        %298 = vmatpush1.bf16.msra.mxu0 0
        %299 = vmatprep.subr.bf16.mxu0 0
        %300 = vmatpush1.bf16.msra.mxu0 0
        %301 = vmatprep.subr.bf16.mxu0 0
        %302 = vmatpush1.bf16.msra.mxu0 0
        %303 = vmatprep.subr.bf16.mxu0 0
        %304 = vmatpush1.bf16.msra.mxu0 0
        %305 = vmatprep.subr.bf16.mxu0 0
        %306 = vmatpush1.bf16.msra.mxu0 0
        %307 = vmatprep.subr.bf16.mxu0 0
        %308 = vmatpush1.bf16.msra.mxu0 0
        %309 = vmatprep.subr.bf16.mxu0 0
        %310 = vmatpush1.bf16.msra.mxu0 0
        %311 = vmatprep.subr.bf16.mxu0 0
        %312 = vmatpush1.bf16.msra.mxu0 0
        %313 = vmatprep.subr.bf16.mxu0 0
        %314 = vmatpush1.bf16.msra.mxu0 0
        %315 = vmatprep.subr.bf16.mxu0 0
        %316 = vmatpush1.bf16.msra.mxu0 0
        %317 = vmatprep.mubr.bf16.mxu0 0
        %318 = vmatmul.mubr.bf16.gmra.mrb[0].mxu0 %v258
        %v319 = vpop.f32.mrb[0].mxu0
        %v320 = vadd.f32 %v255, %v319
        %v321 = vpop.f32.mrb[0].mxu0
        %v322 = vpop.f32.mrb[0].mxu0
        %v323 = vadd.f32 %v255, %v322
        %v324 = vpop.f32.mrb[0].mxu0
        %325 = vmatprep.mubr.bf16.mxu0 0
        %326 = vmatmul.mubr.bf16.gmra.mrb[0].mxu0 %v261
        %v327 = vpop.f32.mrb[0].mxu0
        %v328 = vadd.f32 %v255, %v327
        %v329 = vpop.f32.mrb[0].mxu0
        %v330 = vpop.f32.mrb[0].mxu0
        %v331 = vadd.f32 %v255, %v330
        %v332 = vpop.f32.mrb[0].mxu0
        %333 = vmatprep.mubr.bf16.mxu0 0
        %334 = vmatmul.mubr.bf16.gmra.mrb[0].mxu0 %v264
        %v335 = vpop.f32.mrb[0].mxu0
        %v336 = vadd.f32 %v255, %v335
        %v337 = vpop.f32.mrb[0].mxu0
        %v338 = vpop.f32.mrb[0].mxu0
        %v339 = vadd.f32 %v255, %v338
        %v340 = vpop.f32.mrb[0].mxu0
        %341 = vmatprep.mubr.bf16.mxu0 0
        %342 = vmatmul.mubr.bf16.gmra.mrb[0].mxu0 %v267
        %v343 = vpop.f32.mrb[0].mxu0
        %v344 = vadd.f32 %v255, %v343
        %v345 = vpop.f32.mrb[0].mxu0
        %v346 = vpop.f32.mrb[0].mxu0
        %v347 = vadd.f32 %v255, %v346
        %v348 = vpop.f32.mrb[0].mxu0
        %349 = vmatprep.mubr.bf16.mxu0 0
        %350 = vmatmul.mubr.bf16.gmra.mrb[0].mxu0 %v270
        %v351 = vpop.f32.mrb[0].mxu0
        %v352 = vadd.f32 %v255, %v351
        %v353 = vpop.f32.mrb[0].mxu0
        %v354 = vpop.f32.mrb[0].mxu0
        %v355 = vadd.f32 %v255, %v354
        %v356 = vpop.f32.mrb[0].mxu0
        %357 = vmatprep.mubr.bf16.mxu0 0
        %358 = vmatmul.mubr.bf16.gmra.mrb[0].mxu0 %v273
        %v359 = vpop.f32.mrb[0].mxu0
        %v360 = vadd.f32 %v255, %v359
        %v361 = vpop.f32.mrb[0].mxu0
        %v362 = vpop.f32.mrb[0].mxu0
        %v363 = vadd.f32 %v255, %v362
        %v364 = vpop.f32.mrb[0].mxu0
        %365 = vmatprep.mubr.bf16.mxu0 0
        %366 = vmatmul.mubr.bf16.gmra.mrb[0].mxu0 %v276
        %v367 = vpop.f32.mrb[0].mxu0
        %v368 = vadd.f32 %v255, %v367
        %v369 = vpop.f32.mrb[0].mxu0
        %v370 = vpop.f32.mrb[0].mxu0
        %v371 = vadd.f32 %v255, %v370
        %v372 = vpop.f32.mrb[0].mxu0
        %373 = vmatprep.mubr.bf16.mxu0 0
        %374 = vmatmul.mubr.bf16.gmra.mrb[0].mxu0 %v279
        %v375 = vpop.f32.mrb[0].mxu0
        %v376 = vadd.f32 %v255, %v375
        %v377 = vpop.f32.mrb[0].mxu0
        %v378 = vpop.f32.mrb[0].mxu0
        %v379 = vadd.f32 %v255, %v378
        %v380 = vpop.f32.mrb[0].mxu0
        %381 = vdwg.mxu0
        %v382 = vmax.f32 %v320, 0.0
        %v383 = vmax.f32 %v323, 0.0
        %v384 = vmax.f32 %v328, 0.0
        %v385 = vmax.f32 %v331, 0.0
        %v386 = vmax.f32 %v336, 0.0
        %v387 = vmax.f32 %v339, 0.0
        %v388 = vmax.f32 %v344, 0.0
        %v389 = vmax.f32 %v347, 0.0
        %v390 = vmax.f32 %v352, 0.0
        %v391 = vmax.f32 %v355, 0.0
        %v392 = vmax.f32 %v360, 0.0
        %v393 = vmax.f32 %v363, 0.0
        %v394 = vmax.f32 %v368, 0.0
        %v395 = vmax.f32 %v371, 0.0
        %v396 = vmax.f32 %v376, 0.0
        %v397 = vmax.f32 %v379, 0.0
        %v398 = vpack.c.bf16 %v383, %v382
        %v399 = vpack.c.bf16 %v385, %v384
        %v400 = vpack.c.bf16 %v387, %v386
        %v401 = vpack.c.bf16 %v389, %v388
        %v402 = vpack.c.bf16 %v391, %v390
        %v403 = vpack.c.bf16 %v393, %v392
        %v404 = vpack.c.bf16 %v395, %v394
        %v405 = vpack.c.bf16 %v397, %v396
        %v406 = vlaneseq
        %v407 = vshrl.u32 %v406, 7
        %v408 = vsub.s32 0, %v407
        %v409 = vrot.slane %v247, %v408
        %v426 = vunpack.c.l.b16 %v198
        %v427 = vunpack.c.l.b16 %v199
        %v428 = vunpack.c.l.b16 %v200
        %v429 = vunpack.c.l.b16 %v201
        %v430 = vunpack.c.l.b16 %v202
        %v431 = vunpack.c.l.b16 %v203
        %v432 = vunpack.c.l.b16 %v204
        %v433 = vunpack.c.l.b16 %v205
        %v434 = vunpack.c.l.b16 %v206
        %v435 = vunpack.c.l.b16 %v207
        %v436 = vunpack.c.l.b16 %v208
        %v437 = vunpack.c.l.b16 %v209
        %v438 = vunpack.c.l.b16 %v210
        %v439 = vunpack.c.l.b16 %v211
        %v440 = vunpack.c.l.b16 %v212
        %v441 = vunpack.c.l.b16 %v213
        %v442 = vpack.c.b16 %v427, %v426
        %v443 = vpack.c.b16 %v429, %v428
        %v444 = vpack.c.b16 %v431, %v430
        %v445 = vpack.c.b16 %v433, %v432
        %v446 = vpack.c.b16 %v435, %v434
        %v447 = vpack.c.b16 %v437, %v436
        %v448 = vpack.c.b16 %v439, %v438
        %v449 = vpack.c.b16 %v441, %v440
        %458 = vmatprep.subr.bf16.mxu0 0
        %459 = vmatpush1.bf16.msra.mxu0 %v442
        %460 = vmatprep.subr.bf16.mxu0 0
        %461 = vmatpush1.bf16.msra.mxu0 %v443
        %462 = vmatprep.subr.bf16.mxu0 0
        %463 = vmatpush1.bf16.msra.mxu0 %v444
        %464 = vmatprep.subr.bf16.mxu0 0
        %465 = vmatpush1.bf16.msra.mxu0 %v445
        %466 = vmatprep.subr.bf16.mxu0 0
        %467 = vmatpush1.bf16.msra.mxu0 %v446
        %468 = vmatprep.subr.bf16.mxu0 0
        %469 = vmatpush1.bf16.msra.mxu0 %v447
        %470 = vmatprep.subr.bf16.mxu0 0
        %471 = vmatpush1.bf16.msra.mxu0 %v448
        %472 = vmatprep.subr.bf16.mxu0 0
        %473 = vmatpush1.bf16.msra.mxu0 %v449
        %474 = vmatprep.subr.bf16.mxu0 0
        %475 = vmatpush1.bf16.msra.mxu0 0
        %476 = vmatprep.subr.bf16.mxu0 0
        %477 = vmatpush1.bf16.msra.mxu0 0
        %478 = vmatprep.subr.bf16.mxu0 0
        %479 = vmatpush1.bf16.msra.mxu0 0
        %480 = vmatprep.subr.bf16.mxu0 0
        %481 = vmatpush1.bf16.msra.mxu0 0
        %482 = vmatprep.subr.bf16.mxu0 0
        %483 = vmatpush1.bf16.msra.mxu0 0
        %484 = vmatprep.subr.bf16.mxu0 0
        %485 = vmatpush1.bf16.msra.mxu0 0
        %486 = vmatprep.subr.bf16.mxu0 0
        %487 = vmatpush1.bf16.msra.mxu0 0
        %488 = vmatprep.subr.bf16.mxu0 0
        %489 = vmatpush1.bf16.msra.mxu0 0
        %490 = vmatprep.mubr.bf16.mxu0 0
        %491 = vmatmul.mubr.bf16.gmra.mrb[0].mxu0 %v398
        %v492 = vpop.f32.mrb[0].mxu0
        %v493 = vadd.f32 %v409, %v492
        %v494 = vpop.f32.mrb[0].mxu0
        %v495 = vpop.f32.mrb[0].mxu0
        %v496 = vadd.f32 %v409, %v495
        %v497 = vpop.f32.mrb[0].mxu0
        %498 = vmatprep.mubr.bf16.mxu0 0
        %499 = vmatmul.mubr.bf16.gmra.mrb[0].mxu0 %v399
        %v500 = vpop.f32.mrb[0].mxu0
        %v501 = vadd.f32 %v409, %v500
        %v502 = vpop.f32.mrb[0].mxu0
        %v503 = vpop.f32.mrb[0].mxu0
        %v504 = vadd.f32 %v409, %v503
        %v505 = vpop.f32.mrb[0].mxu0
        %506 = vmatprep.mubr.bf16.mxu0 0
        %507 = vmatmul.mubr.bf16.gmra.mrb[0].mxu0 %v400
        %v508 = vpop.f32.mrb[0].mxu0
        %v509 = vadd.f32 %v409, %v508
        %v510 = vpop.f32.mrb[0].mxu0
        %v511 = vpop.f32.mrb[0].mxu0
        %v512 = vadd.f32 %v409, %v511
        %v513 = vpop.f32.mrb[0].mxu0
        %514 = vmatprep.mubr.bf16.mxu0 0
        %515 = vmatmul.mubr.bf16.gmra.mrb[0].mxu0 %v401
        %v516 = vpop.f32.mrb[0].mxu0
        %v517 = vadd.f32 %v409, %v516
        %v518 = vpop.f32.mrb[0].mxu0
        %v519 = vpop.f32.mrb[0].mxu0
        %v520 = vadd.f32 %v409, %v519
        %v521 = vpop.f32.mrb[0].mxu0
        %522 = vmatprep.mubr.bf16.mxu0 0
        %523 = vmatmul.mubr.bf16.gmra.mrb[0].mxu0 %v402
        %v524 = vpop.f32.mrb[0].mxu0
        %v525 = vadd.f32 %v409, %v524
        %v526 = vpop.f32.mrb[0].mxu0
        %v527 = vpop.f32.mrb[0].mxu0
        %v528 = vadd.f32 %v409, %v527
        %v529 = vpop.f32.mrb[0].mxu0
        %530 = vmatprep.mubr.bf16.mxu0 0
        %531 = vmatmul.mubr.bf16.gmra.mrb[0].mxu0 %v403
        %v532 = vpop.f32.mrb[0].mxu0
        %v533 = vadd.f32 %v409, %v532
        %v534 = vpop.f32.mrb[0].mxu0
        %v535 = vpop.f32.mrb[0].mxu0
        %v536 = vadd.f32 %v409, %v535
        %v537 = vpop.f32.mrb[0].mxu0
        %538 = vmatprep.mubr.bf16.mxu0 0
        %539 = vmatmul.mubr.bf16.gmra.mrb[0].mxu0 %v404
        %v540 = vpop.f32.mrb[0].mxu0
        %v541 = vadd.f32 %v409, %v540
        %v542 = vpop.f32.mrb[0].mxu0
        %v543 = vpop.f32.mrb[0].mxu0
        %v544 = vadd.f32 %v409, %v543
        %v545 = vpop.f32.mrb[0].mxu0
        %546 = vmatprep.mubr.bf16.mxu0 0
        %547 = vmatmul.mubr.bf16.gmra.mrb[0].mxu0 %v405
        %v548 = vpop.f32.mrb[0].mxu0
        %v549 = vadd.f32 %v409, %v548
        %v550 = vpop.f32.mrb[0].mxu0
        %v551 = vpop.f32.mrb[0].mxu0
        %v552 = vadd.f32 %v409, %v551
        %v553 = vpop.f32.mrb[0].mxu0
        %554 = vdwg.mxu0
        %v555 = vmax.f32 %v493, 0.0
        %v556 = vmax.f32 %v496, 0.0
        %v557 = vmax.f32 %v501, 0.0
        %v558 = vmax.f32 %v504, 0.0
        %v559 = vmax.f32 %v509, 0.0
        %v560 = vmax.f32 %v512, 0.0
        %v561 = vmax.f32 %v517, 0.0
        %v562 = vmax.f32 %v520, 0.0
        %v563 = vmax.f32 %v525, 0.0
        %v564 = vmax.f32 %v528, 0.0
        %v565 = vmax.f32 %v533, 0.0
        %v566 = vmax.f32 %v536, 0.0
        %v567 = vmax.f32 %v541, 0.0
        %v568 = vmax.f32 %v544, 0.0
        %v569 = vmax.f32 %v549, 0.0
        %v570 = vmax.f32 %v552, 0.0
        %v571 = vpack.c.bf16 %v556, %v555
        %v572 = vpack.c.bf16 %v558, %v557
        %v573 = vpack.c.bf16 %v560, %v559
        %v574 = vpack.c.bf16 %v562, %v561
        %v575 = vpack.c.bf16 %v564, %v563
        %v576 = vpack.c.bf16 %v566, %v565
        %v577 = vpack.c.bf16 %v568, %v567
        %v578 = vpack.c.bf16 %v570, %v569
        %v579 = vlaneseq
        %v580 = vshrl.u32 %v579, 7
        %v581 = vsub.s32 0, %v580
        %v582 = vrot.slane %v248, %v581
        %v599 = vunpack.c.l.b16 %v214
        %v600 = vunpack.c.l.b16 %v215
        %v601 = vunpack.c.l.b16 %v216
        %v602 = vunpack.c.l.b16 %v217
        %v603 = vunpack.c.l.b16 %v218
        %v604 = vunpack.c.l.b16 %v219
        %v605 = vunpack.c.l.b16 %v220
        %v606 = vunpack.c.l.b16 %v221
        %v607 = vunpack.c.l.b16 %v222
        %v608 = vunpack.c.l.b16 %v223
        %v609 = vunpack.c.l.b16 %v224
        %v610 = vunpack.c.l.b16 %v225
        %v611 = vunpack.c.l.b16 %v226
        %v612 = vunpack.c.l.b16 %v227
        %v613 = vunpack.c.l.b16 %v228
        %v614 = vunpack.c.l.b16 %v229
        %v615 = vpack.c.b16 %v600, %v599
        %v616 = vpack.c.b16 %v602, %v601
        %v617 = vpack.c.b16 %v604, %v603
        %v618 = vpack.c.b16 %v606, %v605
        %v619 = vpack.c.b16 %v608, %v607
        %v620 = vpack.c.b16 %v610, %v609
        %v621 = vpack.c.b16 %v612, %v611
        %v622 = vpack.c.b16 %v614, %v613
        %631 = vmatprep.subr.bf16.mxu0 0
        %632 = vmatpush1.bf16.msra.mxu0 %v615
        %633 = vmatprep.subr.bf16.mxu0 0
        %634 = vmatpush1.bf16.msra.mxu0 %v616
        %635 = vmatprep.subr.bf16.mxu0 0
        %636 = vmatpush1.bf16.msra.mxu0 %v617
        %637 = vmatprep.subr.bf16.mxu0 0
        %638 = vmatpush1.bf16.msra.mxu0 %v618
        %639 = vmatprep.subr.bf16.mxu0 0
        %640 = vmatpush1.bf16.msra.mxu0 %v619
        %641 = vmatprep.subr.bf16.mxu0 0
        %642 = vmatpush1.bf16.msra.mxu0 %v620
        %643 = vmatprep.subr.bf16.mxu0 0
        %644 = vmatpush1.bf16.msra.mxu0 %v621
        %645 = vmatprep.subr.bf16.mxu0 0
        %646 = vmatpush1.bf16.msra.mxu0 %v622
        %647 = vmatprep.subr.bf16.mxu0 0
        %648 = vmatpush1.bf16.msra.mxu0 0
        %649 = vmatprep.subr.bf16.mxu0 0
        %650 = vmatpush1.bf16.msra.mxu0 0
        %651 = vmatprep.subr.bf16.mxu0 0
        %652 = vmatpush1.bf16.msra.mxu0 0
        %653 = vmatprep.subr.bf16.mxu0 0
        %654 = vmatpush1.bf16.msra.mxu0 0
        %655 = vmatprep.subr.bf16.mxu0 0
        %656 = vmatpush1.bf16.msra.mxu0 0
        %657 = vmatprep.subr.bf16.mxu0 0
        %658 = vmatpush1.bf16.msra.mxu0 0
        %659 = vmatprep.subr.bf16.mxu0 0
        %660 = vmatpush1.bf16.msra.mxu0 0
        %661 = vmatprep.subr.bf16.mxu0 0
        %662 = vmatpush1.bf16.msra.mxu0 0
        %663 = vmatprep.mubr.bf16.mxu0 0
        %664 = vmatmul.mubr.bf16.gmra.mrb[0].mxu0 %v571
        %v665 = vpop.f32.mrb[0].mxu0
        %v666 = vadd.f32 %v582, %v665
        %v667 = vpop.f32.mrb[0].mxu0
        %v668 = vpop.f32.mrb[0].mxu0
        %v669 = vadd.f32 %v582, %v668
        %v670 = vpop.f32.mrb[0].mxu0
        %671 = vmatprep.mubr.bf16.mxu0 0
        %672 = vmatmul.mubr.bf16.gmra.mrb[0].mxu0 %v572
        %v673 = vpop.f32.mrb[0].mxu0
        %v674 = vadd.f32 %v582, %v673
        %v675 = vpop.f32.mrb[0].mxu0
        %v676 = vpop.f32.mrb[0].mxu0
        %v677 = vadd.f32 %v582, %v676
        %v678 = vpop.f32.mrb[0].mxu0
        %679 = vmatprep.mubr.bf16.mxu0 0
        %680 = vmatmul.mubr.bf16.gmra.mrb[0].mxu0 %v573
        %v681 = vpop.f32.mrb[0].mxu0
        %v682 = vadd.f32 %v582, %v681
        %v683 = vpop.f32.mrb[0].mxu0
        %v684 = vpop.f32.mrb[0].mxu0
        %v685 = vadd.f32 %v582, %v684
        %v686 = vpop.f32.mrb[0].mxu0
        %687 = vmatprep.mubr.bf16.mxu0 0
        %688 = vmatmul.mubr.bf16.gmra.mrb[0].mxu0 %v574
        %v689 = vpop.f32.mrb[0].mxu0
        %v690 = vadd.f32 %v582, %v689
        %v691 = vpop.f32.mrb[0].mxu0
        %v692 = vpop.f32.mrb[0].mxu0
        %v693 = vadd.f32 %v582, %v692
        %v694 = vpop.f32.mrb[0].mxu0
        %695 = vmatprep.mubr.bf16.mxu0 0
        %696 = vmatmul.mubr.bf16.gmra.mrb[0].mxu0 %v575
        %v697 = vpop.f32.mrb[0].mxu0
        %v698 = vadd.f32 %v582, %v697
        %v699 = vpop.f32.mrb[0].mxu0
        %v700 = vpop.f32.mrb[0].mxu0
        %v701 = vadd.f32 %v582, %v700
        %v702 = vpop.f32.mrb[0].mxu0
        %703 = vmatprep.mubr.bf16.mxu0 0
        %704 = vmatmul.mubr.bf16.gmra.mrb[0].mxu0 %v576
        %v705 = vpop.f32.mrb[0].mxu0
        %v706 = vadd.f32 %v582, %v705
        %v707 = vpop.f32.mrb[0].mxu0
        %v708 = vpop.f32.mrb[0].mxu0
        %v709 = vadd.f32 %v582, %v708
        %v710 = vpop.f32.mrb[0].mxu0
        %711 = vmatprep.mubr.bf16.mxu0 0
        %712 = vmatmul.mubr.bf16.gmra.mrb[0].mxu0 %v577
        %v713 = vpop.f32.mrb[0].mxu0
        %v714 = vadd.f32 %v582, %v713
        %v715 = vpop.f32.mrb[0].mxu0
        %v716 = vpop.f32.mrb[0].mxu0
        %v717 = vadd.f32 %v582, %v716
        %v718 = vpop.f32.mrb[0].mxu0
        %719 = vmatprep.mubr.bf16.mxu0 0
        %720 = vmatmul.mubr.bf16.gmra.mrb[0].mxu0 %v578
        %v721 = vpop.f32.mrb[0].mxu0
        %v722 = vadd.f32 %v582, %v721
        %v723 = vpop.f32.mrb[0].mxu0
        %v724 = vpop.f32.mrb[0].mxu0
        %v725 = vadd.f32 %v582, %v724
        %v726 = vpop.f32.mrb[0].mxu0
        %727 = vdwg.mxu0
        %vm728 = vcmp.eq.s32.totalorder %v251, 0
        %v729 = vmax.f32 %v666, 0.0
        %v730 = vmax.f32 %v669, 0.0
        %v731 = vmax.f32 %v674, 0.0
        %v732 = vmax.f32 %v677, 0.0
        %v733 = vmax.f32 %v682, 0.0
        %v734 = vmax.f32 %v685, 0.0
        %v735 = vmax.f32 %v690, 0.0
        %v736 = vmax.f32 %v693, 0.0
        %v737 = vmax.f32 %v698, 0.0
        %v738 = vmax.f32 %v701, 0.0
        %v739 = vmax.f32 %v706, 0.0
        %v740 = vmax.f32 %v709, 0.0
        %v741 = vmax.f32 %v714, 0.0
        %v742 = vmax.f32 %v717, 0.0
        %v743 = vmax.f32 %v722, 0.0
        %v744 = vmax.f32 %v725, 0.0
        %v745 = vsel %vm728, 1, 0
        %vm746 = vcmp.eq.s32.totalorder %v745, 1
        %v747 = vsel %vm746, %v666, %v729
        %v748 = vsel %vm746, %v669, %v730
        %v749 = vsel %vm746, %v674, %v731
        %v750 = vsel %vm746, %v677, %v732
        %v751 = vsel %vm746, %v682, %v733
        %v752 = vsel %vm746, %v685, %v734
        %v753 = vsel %vm746, %v690, %v735
        %v754 = vsel %vm746, %v693, %v736
        %v755 = vsel %vm746, %v698, %v737
        %v756 = vsel %vm746, %v701, %v738
        %v757 = vsel %vm746, %v706, %v739
        %v758 = vsel %vm746, %v709, %v740
        %v759 = vsel %vm746, %v714, %v741
        %v760 = vsel %vm746, %v717, %v742
        %v761 = vsel %vm746, %v722, %v743
        %v762 = vsel %vm746, %v725, %v744
        %v763 = vpack.c.bf16 %v748, %v747
        %v764 = vpack.c.bf16 %v750, %v749
        %v765 = vpack.c.bf16 %v752, %v751
        %v766 = vpack.c.bf16 %v754, %v753
        %v767 = vpack.c.bf16 %v756, %v755
        %v768 = vpack.c.bf16 %v758, %v757
        %v769 = vpack.c.bf16 %v760, %v759
        %v770 = vpack.c.bf16 %v762, %v761
        %v771 = vlaneseq
        %v772 = vshrl.u32 %v771, 7
        %v773 = vsub.s32 0, %v772
        %v774 = vrot.slane %v249, %v773
        %v791 = vunpack.c.l.b16 %v230
        %v792 = vunpack.c.l.b16 %v231
        %v793 = vunpack.c.l.b16 %v232
        %v794 = vunpack.c.l.b16 %v233
        %v795 = vunpack.c.l.b16 %v234
        %v796 = vunpack.c.l.b16 %v235
        %v797 = vunpack.c.l.b16 %v236
        %v798 = vunpack.c.l.b16 %v237
        %v799 = vunpack.c.l.b16 %v238
        %v800 = vunpack.c.l.b16 %v239
        %v801 = vunpack.c.l.b16 %v240
        %v802 = vunpack.c.l.b16 %v241
        %v803 = vunpack.c.l.b16 %v242
        %v804 = vunpack.c.l.b16 %v243
        %v805 = vunpack.c.l.b16 %v244
        %v806 = vunpack.c.l.b16 %v245
        %v807 = vpack.c.b16 %v792, %v791
        %v808 = vpack.c.b16 %v794, %v793
        %v809 = vpack.c.b16 %v796, %v795
        %v810 = vpack.c.b16 %v798, %v797
        %v811 = vpack.c.b16 %v800, %v799
        %v812 = vpack.c.b16 %v802, %v801
        %v813 = vpack.c.b16 %v804, %v803
        %v814 = vpack.c.b16 %v806, %v805
        %823 = vmatprep.subr.bf16.mxu0 0
        %824 = vmatpush1.bf16.msra.mxu0 %v807
        %825 = vmatprep.subr.bf16.mxu0 0
        %826 = vmatpush1.bf16.msra.mxu0 %v808
        %827 = vmatprep.subr.bf16.mxu0 0
        %828 = vmatpush1.bf16.msra.mxu0 %v809
        %829 = vmatprep.subr.bf16.mxu0 0
        %830 = vmatpush1.bf16.msra.mxu0 %v810
        %831 = vmatprep.subr.bf16.mxu0 0
        %832 = vmatpush1.bf16.msra.mxu0 %v811
        %833 = vmatprep.subr.bf16.mxu0 0
        %834 = vmatpush1.bf16.msra.mxu0 %v812
        %835 = vmatprep.subr.bf16.mxu0 0
        %836 = vmatpush1.bf16.msra.mxu0 %v813
        %837 = vmatprep.subr.bf16.mxu0 0
        %838 = vmatpush1.bf16.msra.mxu0 %v814
        %839 = vmatprep.subr.bf16.mxu0 0
        %840 = vmatpush1.bf16.msra.mxu0 0
        %841 = vmatprep.subr.bf16.mxu0 0
        %842 = vmatpush1.bf16.msra.mxu0 0
        %843 = vmatprep.subr.bf16.mxu0 0
        %844 = vmatpush1.bf16.msra.mxu0 0
        %845 = vmatprep.subr.bf16.mxu0 0
        %846 = vmatpush1.bf16.msra.mxu0 0
        %847 = vmatprep.subr.bf16.mxu0 0
        %848 = vmatpush1.bf16.msra.mxu0 0
        %849 = vmatprep.subr.bf16.mxu0 0
        %850 = vmatpush1.bf16.msra.mxu0 0
        %851 = vmatprep.subr.bf16.mxu0 0
        %852 = vmatpush1.bf16.msra.mxu0 0
        %853 = vmatprep.subr.bf16.mxu0 0
        %854 = vmatpush1.bf16.msra.mxu0 0
        %855 = vmatprep.mubr.bf16.mxu0 0
        %856 = vmatmul.mubr.bf16.gmra.mrb[0].mxu0 %v763
        %v857 = vpop.f32.mrb[0].mxu0
        %v858 = vadd.f32 %v774, %v857
        %v859 = vpop.f32.mrb[0].mxu0
        %v860 = vpop.f32.mrb[0].mxu0
        %v861 = vadd.f32 %v774, %v860
        %v862 = vpop.f32.mrb[0].mxu0
        %863 = vmatprep.mubr.bf16.mxu0 0
        %864 = vmatmul.mubr.bf16.gmra.mrb[0].mxu0 %v764
        %v865 = vpop.f32.mrb[0].mxu0
        %v866 = vadd.f32 %v774, %v865
        %v867 = vpop.f32.mrb[0].mxu0
        %v868 = vpop.f32.mrb[0].mxu0
        %v869 = vadd.f32 %v774, %v868
        %v870 = vpop.f32.mrb[0].mxu0
        %871 = vmatprep.mubr.bf16.mxu0 0
        %872 = vmatmul.mubr.bf16.gmra.mrb[0].mxu0 %v765
        %v873 = vpop.f32.mrb[0].mxu0
        %v874 = vadd.f32 %v774, %v873
        %v875 = vpop.f32.mrb[0].mxu0
        %v876 = vpop.f32.mrb[0].mxu0
        %v877 = vadd.f32 %v774, %v876
        %v878 = vpop.f32.mrb[0].mxu0
        %879 = vmatprep.mubr.bf16.mxu0 0
        %880 = vmatmul.mubr.bf16.gmra.mrb[0].mxu0 %v766
        %v881 = vpop.f32.mrb[0].mxu0
        %v882 = vadd.f32 %v774, %v881
        %v883 = vpop.f32.mrb[0].mxu0
        %v884 = vpop.f32.mrb[0].mxu0
        %v885 = vadd.f32 %v774, %v884
        %v886 = vpop.f32.mrb[0].mxu0
        %887 = vmatprep.mubr.bf16.mxu0 0
        %888 = vmatmul.mubr.bf16.gmra.mrb[0].mxu0 %v767
        %v889 = vpop.f32.mrb[0].mxu0
        %v890 = vadd.f32 %v774, %v889
        %v891 = vpop.f32.mrb[0].mxu0
        %v892 = vpop.f32.mrb[0].mxu0
        %v893 = vadd.f32 %v774, %v892
        %v894 = vpop.f32.mrb[0].mxu0
        %895 = vmatprep.mubr.bf16.mxu0 0
        %896 = vmatmul.mubr.bf16.gmra.mrb[0].mxu0 %v768
        %v897 = vpop.f32.mrb[0].mxu0
        %v898 = vadd.f32 %v774, %v897
        %v899 = vpop.f32.mrb[0].mxu0
        %v900 = vpop.f32.mrb[0].mxu0
        %v901 = vadd.f32 %v774, %v900
        %v902 = vpop.f32.mrb[0].mxu0
        %903 = vmatprep.mubr.bf16.mxu0 0
        %904 = vmatmul.mubr.bf16.gmra.mrb[0].mxu0 %v769
        %v905 = vpop.f32.mrb[0].mxu0
        %v906 = vadd.f32 %v774, %v905
        %v907 = vpop.f32.mrb[0].mxu0
        %v908 = vpop.f32.mrb[0].mxu0
        %v909 = vadd.f32 %v774, %v908
        %v910 = vpop.f32.mrb[0].mxu0
        %911 = vmatprep.mubr.bf16.mxu0 0
        %912 = vmatmul.mubr.bf16.gmra.mrb[0].mxu0 %v770
        %v913 = vpop.f32.mrb[0].mxu0
        %v914 = vadd.f32 %v774, %v913
        %v915 = vpop.f32.mrb[0].mxu0
        %v916 = vpop.f32.mrb[0].mxu0
        %v917 = vadd.f32 %v774, %v916
        %v918 = vpop.f32.mrb[0].mxu0
        %919 = vdwg.mxu0
        %vm920 = vcmp.ge.s32.totalorder %v251, 1
        %vm921 = vcmp.lt.s32.totalorder %v251, 7
        %vm922 = vmand %vm920, %vm921
        %v923 = vsel %vm922, 1, 0
        %vm924 = vcmp.eq.s32.totalorder %v923, 1
        %v925 = vsel %vm924, %v858, -inf
        %v926 = vsel %vm924, %v861, -inf
        %v927 = vsel %vm924, %v866, -inf
        %v928 = vsel %vm924, %v869, -inf
        %v929 = vsel %vm924, %v874, -inf
        %v930 = vsel %vm924, %v877, -inf
        %v931 = vsel %vm924, %v882, -inf
        %v932 = vsel %vm924, %v885, -inf
        %v933 = vsel %vm924, %v890, -inf
        %v934 = vsel %vm924, %v893, -inf
        %v935 = vsel %vm924, %v898, -inf
        %v936 = vsel %vm924, %v901, -inf
        %v937 = vsel %vm924, %v906, -inf
        %v938 = vsel %vm924, %v909, -inf
        %v939 = vsel %vm924, %v914, -inf
        %v940 = vsel %vm924, %v917, -inf
        %941 = vmax.xlane.f32.xlu0 %v925
        %v942 = vpop.xlane.xlu0 %941
        %943 = vmax.xlane.f32.xlu0 %v926
        %v944 = vpop.xlane.xlu0 %943
        %945 = vmax.xlane.f32.xlu0 %v927
        %v946 = vpop.xlane.xlu0 %945
        %947 = vmax.xlane.f32.xlu0 %v928
        %v948 = vpop.xlane.xlu0 %947
        %949 = vmax.xlane.f32.xlu0 %v929
        %v950 = vpop.xlane.xlu0 %949
        %951 = vmax.xlane.f32.xlu0 %v930
        %v952 = vpop.xlane.xlu0 %951
        %953 = vmax.xlane.f32.xlu0 %v931
        %v954 = vpop.xlane.xlu0 %953
        %955 = vmax.xlane.f32.xlu0 %v932
        %v956 = vpop.xlane.xlu0 %955
        %957 = vmax.xlane.f32.xlu0 %v933
        %v958 = vpop.xlane.xlu0 %957
        %959 = vmax.xlane.f32.xlu0 %v934
        %v960 = vpop.xlane.xlu0 %959
        %961 = vmax.xlane.f32.xlu0 %v935
        %v962 = vpop.xlane.xlu0 %961
        %963 = vmax.xlane.f32.xlu0 %v936
        %v964 = vpop.xlane.xlu0 %963
        %965 = vmax.xlane.f32.xlu0 %v937
        %v966 = vpop.xlane.xlu0 %965
        %967 = vmax.xlane.f32.xlu0 %v938
        %v968 = vpop.xlane.xlu0 %967
        %969 = vmax.xlane.f32.xlu0 %v939
        %v970 = vpop.xlane.xlu0 %969
        %971 = vmax.xlane.f32.xlu0 %v940
        %v972 = vpop.xlane.xlu0 %971
        %v973 = vsub.f32 %v858, %v942
        %v974 = vsub.f32 %v861, %v944
        %v975 = vsub.f32 %v866, %v946
        %v976 = vsub.f32 %v869, %v948
        %v977 = vsub.f32 %v874, %v950
        %v978 = vsub.f32 %v877, %v952
        %v979 = vsub.f32 %v882, %v954
        %v980 = vsub.f32 %v885, %v956
        %v981 = vsub.f32 %v890, %v958
        %v982 = vsub.f32 %v893, %v960
        %v983 = vsub.f32 %v898, %v962
        %v984 = vsub.f32 %v901, %v964
        %v985 = vsub.f32 %v906, %v966
        %v986 = vsub.f32 %v909, %v968
        %v987 = vsub.f32 %v914, %v970
        %v988 = vsub.f32 %v917, %v972
        %v989 = vmul.f32 %v973, 1.442695
        %v990 = vpow.pop %v989
        %v991 = vmul.f32 %v974, 1.442695
        %v992 = vpow.pop %v991
        %v993 = vmul.f32 %v975, 1.442695
        %v994 = vpow.pop %v993
        %v995 = vmul.f32 %v976, 1.442695
        %v996 = vpow.pop %v995
        %v997 = vmul.f32 %v977, 1.442695
        %v998 = vpow.pop %v997
        %v999 = vmul.f32 %v978, 1.442695
        %v1000 = vpow.pop %v999
        %v1001 = vmul.f32 %v979, 1.442695
        %v1002 = vpow.pop %v1001
        %v1003 = vmul.f32 %v980, 1.442695
        %v1004 = vpow.pop %v1003
        %v1005 = vmul.f32 %v981, 1.442695
        %v1006 = vpow.pop %v1005
        %v1007 = vmul.f32 %v982, 1.442695
        %v1008 = vpow.pop %v1007
        %v1009 = vmul.f32 %v983, 1.442695
        %v1010 = vpow.pop %v1009
        %v1011 = vmul.f32 %v984, 1.442695
        %v1012 = vpow.pop %v1011
        %v1013 = vmul.f32 %v985, 1.442695
        %v1014 = vpow.pop %v1013
        %v1015 = vmul.f32 %v986, 1.442695
        %v1016 = vpow.pop %v1015
        %v1017 = vmul.f32 %v987, 1.442695
        %v1018 = vpow.pop %v1017
        %v1019 = vmul.f32 %v988, 1.442695
        %v1020 = vpow.pop %v1019
        %v1021 = vsel %vm924, %v990, 0.0
        %v1022 = vsel %vm924, %v992, 0.0
        %v1023 = vsel %vm924, %v994, 0.0
        %v1024 = vsel %vm924, %v996, 0.0
        %v1025 = vsel %vm924, %v998, 0.0
        %v1026 = vsel %vm924, %v1000, 0.0
        %v1027 = vsel %vm924, %v1002, 0.0
        %v1028 = vsel %vm924, %v1004, 0.0
        %v1029 = vsel %vm924, %v1006, 0.0
        %v1030 = vsel %vm924, %v1008, 0.0
        %v1031 = vsel %vm924, %v1010, 0.0
        %v1032 = vsel %vm924, %v1012, 0.0
        %v1033 = vsel %vm924, %v1014, 0.0
        %v1034 = vsel %vm924, %v1016, 0.0
        %v1035 = vsel %vm924, %v1018, 0.0
        %v1036 = vsel %vm924, %v1020, 0.0
        %1037 = vadd.xlane.f32.xlu0 %v1021
        %v1038 = vpop.xlane.xlu0 %1037
        %1039 = vadd.xlane.f32.xlu0 %v1022
        %v1040 = vpop.xlane.xlu0 %1039
        %1041 = vadd.xlane.f32.xlu0 %v1023
        %v1042 = vpop.xlane.xlu0 %1041
        %1043 = vadd.xlane.f32.xlu0 %v1024
        %v1044 = vpop.xlane.xlu0 %1043
        %1045 = vadd.xlane.f32.xlu0 %v1025
        %v1046 = vpop.xlane.xlu0 %1045
        %1047 = vadd.xlane.f32.xlu0 %v1026
        %v1048 = vpop.xlane.xlu0 %1047
        %1049 = vadd.xlane.f32.xlu0 %v1027
        %v1050 = vpop.xlane.xlu0 %1049
        %1051 = vadd.xlane.f32.xlu0 %v1028
        %v1052 = vpop.xlane.xlu0 %1051
        %1053 = vadd.xlane.f32.xlu0 %v1029
        %v1054 = vpop.xlane.xlu0 %1053
        %1055 = vadd.xlane.f32.xlu0 %v1030
        %v1056 = vpop.xlane.xlu0 %1055
        %1057 = vadd.xlane.f32.xlu0 %v1031
        %v1058 = vpop.xlane.xlu0 %1057
        %1059 = vadd.xlane.f32.xlu0 %v1032
        %v1060 = vpop.xlane.xlu0 %1059
        %1061 = vadd.xlane.f32.xlu0 %v1033
        %v1062 = vpop.xlane.xlu0 %1061
        %1063 = vadd.xlane.f32.xlu0 %v1034
        %v1064 = vpop.xlane.xlu0 %1063
        %1065 = vadd.xlane.f32.xlu0 %v1035
        %v1066 = vpop.xlane.xlu0 %1065
        %1067 = vadd.xlane.f32.xlu0 %v1036
        %v1068 = vpop.xlane.xlu0 %1067
        %v1069 = vrcp.pop %v1038
        %v1070 = vrcp.pop %v1040
        %v1071 = vrcp.pop %v1042
        %v1072 = vrcp.pop %v1044
        %v1073 = vrcp.pop %v1046
        %v1074 = vrcp.pop %v1048
        %v1075 = vrcp.pop %v1050
        %v1076 = vrcp.pop %v1052
        %v1077 = vrcp.pop %v1054
        %v1078 = vrcp.pop %v1056
        %v1079 = vrcp.pop %v1058
        %v1080 = vrcp.pop %v1060
        %v1081 = vrcp.pop %v1062
        %v1082 = vrcp.pop %v1064
        %v1083 = vrcp.pop %v1066
        %v1084 = vrcp.pop %v1068
        %v1085 = vmul.f32 %v1021, %v1069
        %v1086 = vmul.f32 %v1022, %v1070
        %v1087 = vmul.f32 %v1023, %v1071
        %v1088 = vmul.f32 %v1024, %v1072
        %v1089 = vmul.f32 %v1025, %v1073
        %v1090 = vmul.f32 %v1026, %v1074
        %v1091 = vmul.f32 %v1027, %v1075
        %v1092 = vmul.f32 %v1028, %v1076
        %v1093 = vmul.f32 %v1029, %v1077
        %v1094 = vmul.f32 %v1030, %v1078
        %v1095 = vmul.f32 %v1031, %v1079
        %v1096 = vmul.f32 %v1032, %v1080
        %v1097 = vmul.f32 %v1033, %v1081
        %v1098 = vmul.f32 %v1034, %v1082
        %v1099 = vmul.f32 %v1035, %v1083
        %v1100 = vmul.f32 %v1036, %v1084
        %v1101 = vsel %vm746, %v666, %v1085
        %v1102 = vsel %vm746, %v669, %v1086
        %v1103 = vsel %vm746, %v674, %v1087
        %v1104 = vsel %vm746, %v677, %v1088
        %v1105 = vsel %vm746, %v682, %v1089
        %v1106 = vsel %vm746, %v685, %v1090
        %v1107 = vsel %vm746, %v690, %v1091
        %v1108 = vsel %vm746, %v693, %v1092
        %v1109 = vsel %vm746, %v698, %v1093
        %v1110 = vsel %vm746, %v701, %v1094
        %v1111 = vsel %vm746, %v706, %v1095
        %v1112 = vsel %vm746, %v709, %v1096
        %v1113 = vsel %vm746, %v714, %v1097
        %v1114 = vsel %vm746, %v717, %v1098
        %v1115 = vsel %vm746, %v722, %v1099
        %v1116 = vsel %vm746, %v725, %v1100
        %1117 = vst [vmem:[%s164] sm:$0xff] %v1101
        %1118 = vst [vmem:[%s164 + $0x8] sm:$0xff] %v1102
        %1119 = vst [vmem:[%s164 + $0x10] sm:$0xff] %v1103
        %1120 = vst [vmem:[%s164 + $0x18] sm:$0xff] %v1104
        %1121 = vst [vmem:[%s164 + $0x20] sm:$0xff] %v1105
        %1122 = vst [vmem:[%s164 + $0x28] sm:$0xff] %v1106
        %1123 = vst [vmem:[%s164 + $0x30] sm:$0xff] %v1107
        %1124 = vst [vmem:[%s164 + $0x38] sm:$0xff] %v1108
        %1125 = vst [vmem:[%s164 + $0x40] sm:$0xff] %v1109
        %1126 = vst [vmem:[%s164 + $0x48] sm:$0xff] %v1110
        %1127 = vst [vmem:[%s164 + $0x50] sm:$0xff] %v1111
        %1128 = vst [vmem:[%s164 + $0x58] sm:$0xff] %v1112
        %1129 = vst [vmem:[%s164 + $0x60] sm:$0xff] %v1113
        %1130 = vst [vmem:[%s164 + $0x68] sm:$0xff] %v1114
        %1131 = vst [vmem:[%s164 + $0x70] sm:$0xff] %v1115
        %1132 = vst [vmem:[%s164 + $0x78] sm:$0xff] %v1116
        %s1133 = sand.u32 %s93, 1
        %s1134 = scalar_lea.sflag [#allocation3], %s1133
        %s1135 = sand.u32 %s93, 1
        %s1136 = smul.addr %s1135, 128
        %s1137 = scalar_lea.vmem [#allocation2], %s1136
        // Predicated region
        $region33: #{tpu_custom_call.1} parent=31 // pred_check
          %p1138 = pneg %p103
        $region34: #{tpu_custom_call.1} parent=31 // pred_check_branch
          %1140 = sbr.rel (%p1138) target = $region36
        $region35: #{tpu_custom_call.1} parent=31 // pred_region
          %s1141 = smul.u32 16, %s17
          %s1143 = ssub.s32 2048, 2048
          %1144 = vsyncadd %s1134, %s1143
          %s1145 = smul.addr %s1141, 128
          %s1146 = scalar_lea.hbm %s3, %s1145
          %s1147 = sshll.u32 %s1137, 4
          %s1148 = int_to_ptr.vmem [resolvable:$true] %s1147
          %1153 = dma.vmem_to_hbm [thread:$0]  %s1148, 2048, %s1146, %s1134, 128, 128, 8
        $region36: #{tpu_custom_call.1} parent=31 // pred_fallthru
          _
      $region32: #{tpu_custom_call.1} parent=5 // pred_fallthru
        _
      %p1154 = scmp.le.s32.totalorder 2, %s12
      // Predicated region
      $region37: #{tpu_custom_call.1} parent=5 // pred_check
        %p1155 = pneg %p1154
      $region38: #{tpu_custom_call.1} parent=5 // pred_check_branch
        %1157 = sbr.rel (%p1155) target = $region40
      $region39: #{tpu_custom_call.1} parent=5 // pred_region
        %s1158 = ssub.s32 %s12, 2
        // Predicated region
        $region41: #{tpu_custom_call.1} parent=39 // pred_check
          %p1159 = pneg %p109
        $region42: #{tpu_custom_call.1} parent=39 // pred_check_branch
          %1161 = sbr.rel (%p1159) target = $region44
        $region43: #{tpu_custom_call.1} parent=39 // pred_region
          %s1162 = sand.u32 %s94, 1
          %s1163 = scalar_lea.sflag [#allocation3], %s1162
          %s1164 = sand.u32 %s94, 1
          %s1165 = smul.addr %s1164, 128
          %s1166 = scalar_lea.vmem [#allocation2], %s1165
          %1167 = dma.done %s1163, 2048
        $region44: #{tpu_custom_call.1} parent=39 // pred_fallthru
          _
      $region40: #{tpu_custom_call.1} parent=5 // pred_fallthru
        _
    $region6: #{tpu_custom_call.1} parent=1 // loop_footer
      %s16 = sadd.s32 1, %s12
    $region7: #{tpu_custom_call.1} parent=1 // loop_footer_branch
      %11 = sbr.rel target = $region3
    $region8: #{tpu_custom_call.1} parent=1 // loop_exit
      _
    %1168 = vsyncpa [#allocation3], 1
    %s1169 = scalar_lea.sflag [#allocation3], 1
    %1170 = vsyncpa %s1169, 1

</llo_original>
